<compile_context>
chip_gen: v5e
topology: v5e:2x2
jax: 0.10.0
libtpu: 0.0.40
codegen_flags: <defaults>
</compile_context>

<pallas_src>
import functools

import jax
import jax.numpy as jnp
from jax import lax
from jax.experimental import pallas as pl
from jax.experimental.pallas import tpu as pltpu

LN_EPS = 1e-5      # nn.LayerNorm default
COS_EPS = 1e-8     # F.cosine_similarity default


def _layernorm(x, g, b):
    x = x.astype(jnp.float32)
    mu = jnp.mean(x, axis=-1, keepdims=True)
    xc = x - mu
    var = jnp.mean(xc * xc, axis=-1, keepdims=True)
    return xc * lax.rsqrt(var + LN_EPS) * g + b


def _full_spec(shape):
    nd = len(shape)
    return pl.BlockSpec(shape, lambda i, _nd=nd: (0,) * _nd)


def _row_tile(rows, cap=512):
    if rows <= cap:
        return rows
    for t in (512, 256, 128, 64, 32, 16, 8):
        if rows % t == 0:
            return t
    return rows


def _batch_tile(batch, patches, row_cap=512):
    bb = 1
    for cand in range(1, batch + 1):
        if batch % cand == 0 and cand * patches <= row_cap:
            bb = cand
    return bb


# ----------------------------------------------------------------------------
# Kernel 1: patch embedding (Conv1d k=stride=patch) on flattened (B*P) rows
# ----------------------------------------------------------------------------
def patch_embed_kernel(xp_ref, w_ref, b_ref, o_ref):
    x = xp_ref[...]                                       # (TM, C*K) bf16
    y = jnp.dot(x, w_ref[...], preferred_element_type=jnp.float32) + b_ref[...]
    # pos_embed is a zero, non-trainable buffer in __init__ -> add elided.
    o_ref[...] = y.astype(o_ref.dtype)


def patch_embed_pallas(xp, w, b):
    R, CK = xp.shape
    E = w.shape[1]
    tm = _row_tile(R)
    return pl.pallas_call(
        patch_embed_kernel,
        out_shape=jax.ShapeDtypeStruct((R, E), jnp.bfloat16),
        grid=(R // tm,),
        in_specs=[
            pl.BlockSpec((tm, CK), lambda i: (i, 0)),
            _full_spec(w.shape),
            _full_spec(b.shape),
        ],
        out_specs=pl.BlockSpec((tm, E), lambda i: (i, 0)),
        compiler_params=pltpu.CompilerParams(dimension_semantics=("parallel",)),
    )(xp, w, b)


# ----------------------------------------------------------------------------
# Kernel 2: one ViT encoder block (pre-norm MHSA + MLP), grid over batch tiles
# ----------------------------------------------------------------------------
def vit_block_kernel(x_ref, ln1g_ref, ln1b_ref, wqkv_ref, bqkv_ref,
                     wproj_ref, bproj_ref, ln2g_ref, ln2b_ref,
                     wfc1_ref, bfc1_ref, wfc2_ref, bfc2_ref, o_ref,
                     *, num_heads, patches):
    R, E = x_ref.shape                                    # R = BB * patches
    bb = R // patches
    dh = E // num_heads
    scale = 1.0 / (dh ** 0.5)

    x = x_ref[...].astype(jnp.float32)                    # residual stream in f32

    # ---- attention (pre-norm) ----
    h = _layernorm(x, ln1g_ref[...], ln1b_ref[...]).astype(jnp.bfloat16)
    qkv = jnp.dot(h, wqkv_ref[...],
                  preferred_element_type=jnp.float32) + bqkv_ref[...]   # (R, 3E) f32
    wproj = wproj_ref[...]                                               # (E, E) bf16

    outs = []
    for b in range(bb):                                   # attention is per-sample
        r0 = b * patches
        acc = None
        for hd in range(num_heads):
            c0 = hd * dh
            q = qkv[r0:r0 + patches, c0:c0 + dh].astype(jnp.bfloat16)
            k = qkv[r0:r0 + patches, E + c0:E + c0 + dh].astype(jnp.bfloat16)
            v = qkv[r0:r0 + patches, 2 * E + c0:2 * E + c0 + dh].astype(jnp.bfloat16)
            # scores without materializing k.T (contract last dims on the MXU)
            s = lax.dot_general(q, k, (((1,), (1,)), ((), ())),
                                preferred_element_type=jnp.float32) * scale
            s = s - jnp.max(s, axis=-1, keepdims=True)
            p = jnp.exp(s)
            p = p * pl.reciprocal(jnp.sum(p, axis=-1, keepdims=True), approx=True)
            ctx = jnp.dot(p.astype(jnp.bfloat16), v,
                          preferred_element_type=jnp.float32).astype(jnp.bfloat16)
            # fold the head-concat into the output projection:
            #   concat_h(ctx_h) @ wproj == sum_h ctx_h @ wproj[h*dh:(h+1)*dh, :]
            o_h = jnp.dot(ctx, wproj[c0:c0 + dh, :],
                          preferred_element_type=jnp.float32)
            acc = o_h if acc is None else acc + o_h
        outs.append(acc)
    attn = jnp.concatenate(outs, axis=0) if bb > 1 else outs[0]
    x = x + attn + bproj_ref[...]

    # ---- MLP (pre-norm) ----
    h2 = _layernorm(x, ln2g_ref[...], ln2b_ref[...]).astype(jnp.bfloat16)
    m = jnp.dot(h2, wfc1_ref[...], preferred_element_type=jnp.float32) + bfc1_ref[...]
    # TODO(synk): timm Block uses exact (erf) GELU; tanh approximation used here.
    m = jax.nn.gelu(m, approximate=True)
    m = jnp.dot(m.astype(jnp.bfloat16), wfc2_ref[...],
                preferred_element_type=jnp.float32) + bfc2_ref[...]
    o_ref[...] = (x + m).astype(o_ref.dtype)


def vit_block_pallas(x, blk, *, num_heads, batch, patches):
    R, E = x.shape
    bb = _batch_tile(batch, patches)
    row_blk = bb * patches
    kern = functools.partial(vit_block_kernel, num_heads=num_heads, patches=patches)
    return pl.pallas_call(
        kern,
        out_shape=jax.ShapeDtypeStruct((R, E), jnp.bfloat16),
        grid=(batch // bb,),
        in_specs=[
            pl.BlockSpec((row_blk, E), lambda i: (i, 0)),
            _full_spec(blk["ln1_g"].shape), _full_spec(blk["ln1_b"].shape),
            _full_spec(blk["wqkv"].shape), _full_spec(blk["bqkv"].shape),
            _full_spec(blk["wproj"].shape), _full_spec(blk["bproj"].shape),
            _full_spec(blk["ln2_g"].shape), _full_spec(blk["ln2_b"].shape),
            _full_spec(blk["wfc1"].shape), _full_spec(blk["bfc1"].shape),
            _full_spec(blk["wfc2"].shape), _full_spec(blk["bfc2"].shape),
        ],
        out_specs=pl.BlockSpec((row_blk, E), lambda i: (i, 0)),
        compiler_params=pltpu.CompilerParams(
            dimension_semantics=("parallel",),
            vmem_limit_bytes=48 * 1024 * 1024,
        ),
    )(x, blk["ln1_g"], blk["ln1_b"], blk["wqkv"], blk["bqkv"],
      blk["wproj"], blk["bproj"], blk["ln2_g"], blk["ln2_b"],
      blk["wfc1"], blk["bfc1"], blk["wfc2"], blk["bfc2"])


# ----------------------------------------------------------------------------
# Kernel 3: final LayerNorm + dim_mapper (conv1 + linear1) + loss, batch-tiled
# ----------------------------------------------------------------------------
def head_kernel(lat_ref, ng_ref, nb_ref, cw_ref, cb_ref, lw_ref, lb_ref, img_ref,
                pred_ref, loss_ref, sse_acc, cos_acc, *, total_batch, patches):
    R, E = lat_ref.shape
    hb = R // patches
    D = lw_ref.shape[1]

    xn = _layernorm(lat_ref[...], ng_ref[...], nb_ref[...])      # (R, E) f32

    # conv1: Conv1d(num_patches, 1, k=1) == weighted sum over the patch axis,
    # expressed as a lane-dense (1, P) @ (P, E) MXU matmul per sample.
    cw = cw_ref[...]                                             # (1, P) f32
    rows = []
    for b in range(hb):
        rows.append(jnp.dot(cw, xn[b * patches:(b + 1) * patches, :],
                            preferred_element_type=jnp.float32))
    pooled = (jnp.concatenate(rows, axis=0) if hb > 1 else rows[0]) + cb_ref[...]

    # linear1
    pred = jnp.dot(pooled.astype(jnp.bfloat16), lw_ref[...],
                   preferred_element_type=jnp.float32) + lb_ref[...]   # (hb, D)
    pred_ref[...] = pred

    img = img_ref[...].astype(jnp.float32)
    diff = pred - img
    sse = jnp.sum(diff * diff)
    pn = jnp.sqrt(jnp.sum(pred * pred, axis=-1, keepdims=True))
    qn = jnp.sqrt(jnp.sum(img * img, axis=-1, keepdims=True))
    cos = jnp.sum(pred * img, axis=-1, keepdims=True) / (
        jnp.maximum(pn, COS_EPS) * jnp.maximum(qn, COS_EPS))
    cos_sum = jnp.sum(cos)

    @pl.when(pl.program_id(0) == 0)
    def _():
        sse_acc[...] = jnp.zeros_like(sse_acc)
        cos_acc[...] = jnp.zeros_like(cos_acc)

    sse_acc[...] += jnp.broadcast_to(sse, (1, 1))
    cos_acc[...] += jnp.broadcast_to(cos_sum, (1, 1))

    # running finalize; value on the last grid step is the full loss.
    loss_ref[...] = (sse_acc[...] / jnp.float32(total_batch * D)
                     + 1.0 - cos_acc[...] / jnp.float32(total_batch))


def head_pallas(latent, ng, nb, cw, cb, lw, lb, img, *, batch, patches):
    R, E = latent.shape
    D = lw.shape[1]
    hb = _batch_tile(batch, patches)
    row_blk = hb * patches
    kern = functools.partial(head_kernel, total_batch=batch, patches=patches)
    return pl.pallas_call(
        kern,
        out_shape=(jax.ShapeDtypeStruct((batch, D), jnp.float32),
                   jax.ShapeDtypeStruct((1, 1), jnp.float32)),
        grid=(batch // hb,),
        in_specs=[
            pl.BlockSpec((row_blk, E), lambda i: (i, 0)),
            _full_spec(ng.shape), _full_spec(nb.shape),
            _full_spec(cw.shape), _full_spec(cb.shape),
            _full_spec(lw.shape), _full_spec(lb.shape),
            pl.BlockSpec((hb, D), lambda i: (i, 0)),
        ],
        out_specs=(pl.BlockSpec((hb, D), lambda i: (i, 0)),
                   pl.BlockSpec((1, 1), lambda i: (0, 0))),
        scratch_shapes=[pltpu.VMEM((1, 1), jnp.float32),
                        pltpu.VMEM((1, 1), jnp.float32)],
        compiler_params=pltpu.CompilerParams(dimension_semantics=("arbitrary",)),
    )(latent, ng, nb, cw, cb, lw, lb, img)


# ----------------------------------------------------------------------------
# Parameter init (deterministic, synthetic) & forward wrapper
# ----------------------------------------------------------------------------
def init_params(key, *, time_len, patch_size, in_chans, embed_dim,
                depth, num_heads, mlp_ratio=4.0, map_out_dim=96):
    P = time_len // patch_size
    Hid = int(embed_dim * mlp_ratio)
    CK = in_chans * patch_size
    keys = jax.random.split(key, 8 + depth)
    bf = jnp.bfloat16

    def nrm(k, shape, s=0.02, dtype=jnp.float32):
        return (s * jax.random.normal(k, shape)).astype(dtype)

    blocks = []
    for d in range(depth):
        bk = jax.random.split(keys[8 + d], 6)
        blocks.append(dict(
            ln1_g=jnp.ones((1, embed_dim), jnp.float32),
            ln1_b=jnp.zeros((1, embed_dim), jnp.float32),
            wqkv=nrm(bk[0], (embed_dim, 3 * embed_dim), dtype=bf),
            bqkv=jnp.zeros((1, 3 * embed_dim), jnp.float32),
            wproj=nrm(bk[1], (embed_dim, embed_dim), dtype=bf),
            bproj=jnp.zeros((1, embed_dim), jnp.float32),
            ln2_g=jnp.ones((1, embed_dim), jnp.float32),
            ln2_b=jnp.zeros((1, embed_dim), jnp.float32),
            wfc1=nrm(bk[2], (embed_dim, Hid), dtype=bf),
            bfc1=nrm(bk[3], (1, Hid)),
            wfc2=nrm(bk[4], (Hid, embed_dim), dtype=bf),
            bfc2=nrm(bk[5], (1, embed_dim)),
        ))

    return dict(
        patch_size=patch_size,
        num_heads=num_heads,
        # Conv1d(in_chans, embed_dim, k=stride=patch) flattened as (C*K, E), bf16
        patch_w=nrm(keys[0], (CK, embed_dim), dtype=bf),
        patch_b=nrm(keys[1], (1, embed_dim)),
        # pos_embed is a zero, non-trainable buffer in __init__ -> elided entirely.
        blocks=blocks,
        norm_g=jnp.ones((1, embed_dim), jnp.float32),
        norm_b=jnp.zeros((1, embed_dim), jnp.float32),
        conv1_w=nrm(keys[2], (1, P)),     # lane-dense Conv1d(num_patches, 1, k=1) weight
        conv1_b=nrm(keys[3], (1, 1)),
        lin_w=nrm(keys[4], (embed_dim, map_out_dim), dtype=bf),
        lin_b=nrm(keys[5], (1, map_out_dim)),
    )


def forward(params, eeg_input, img_embs):
    B, C, T = eeg_input.shape
    K = params["patch_size"]
    P = T // K
    # glue: patchify NCL input to (B*P, C*K) rows, matching the Conv1d weight
    # flattened as (C*K, E).  This one-off HBM transpose is left to XLA.
    xp = (eeg_input.reshape(B, C, P, K).transpose(0, 2, 1, 3)
          .reshape(B * P, C * K).astype(jnp.bfloat16))

    x = patch_embed_pallas(xp, params["patch_w"], params["patch_b"])   # (B*P, E) bf16
    for blk in params["blocks"]:
        x = vit_block_pallas(x, blk, num_heads=params["num_heads"],
                             batch=B, patches=P)

    pred2d, loss = head_pallas(x, params["norm_g"], params["norm_b"],
                               params["conv1_w"], params["conv1_b"],
                               params["lin_w"], params["lin_b"], img_embs,
                               batch=B, patches=P)
    pred = pred2d[:, None, :]          # matches .unsqueeze(1) -> (B, 1, D)
    return pred, loss[0, 0]


if __name__ == "__main__":
    key = jax.random.PRNGKey(0)
    kp, kx, ki = jax.random.split(key, 3)

    # small shapes consistent with the module (num_patches == conv1 in_chans,
    # embed_dim == linear1 in_features, scaled down from 512/4/1024/128/768)
    B, C, T = 2, 8, 32
    PATCH, EMBED, DEPTH, HEADS, D_OUT = 4, 128, 2, 4, 96

    params = init_params(kp, time_len=T, patch_size=PATCH, in_chans=C,
                         embed_dim=EMBED, depth=DEPTH, num_heads=HEADS,
                         map_out_dim=D_OUT)
    eeg = jax.random.normal(kx, (B, C, T), dtype=jnp.float32)
    img_embs = jax.random.normal(ki, (B, D_OUT), dtype=jnp.float32)

    pred, loss = forward(params, eeg, img_embs)
    jax.block_until_ready((pred, loss))
    assert pred.shape == (B, 1, D_OUT)
    assert loss.shape == ()
    print("KERNEL_OK")
</pallas_src>

<mosaic_0001>
module attributes {stable_mosaic.version = 11 : i64} {
  func.func @patch_embed_kernel(%arg0: i32, %arg1: memref<16x32xbf16, #tpu.memory_space<vmem>>, %arg2: memref<32x128xbf16, #tpu.memory_space<vmem>>, %arg3: memref<1x128xf32, #tpu.memory_space<vmem>>, %arg4: memref<16x128xbf16, #tpu.memory_space<vmem>>) attributes {dimension_semantics = [#tpu.dimension_semantics<parallel>], iteration_bounds = array<i64: 1>, scalar_prefetch = 0 : i64, scratch_operands = 0 : i64, tpu.core_type = #tpu.core_type<tc>, window_params = [{transform_indices = @transform_0, window_bounds = array<i64: 16, 32>}, {pipeline_mode = #tpu.pipeline_mode<synchronous>, transform_indices = @transform_1, window_bounds = array<i64: 32, 128>}, {pipeline_mode = #tpu.pipeline_mode<synchronous>, transform_indices = @transform_2, window_bounds = array<i64: 1, 128>}, {transform_indices = @transform_3, window_bounds = array<i64: 16, 128>}]} {
    %c0 = arith.constant 0 : index
    %c0_0 = arith.constant 0 : index
    %0 = vector.load %arg1[%c0, %c0_0] : memref<16x32xbf16, #tpu.memory_space<vmem>>, vector<16x32xbf16>
    %c0_1 = arith.constant 0 : index
    %c0_2 = arith.constant 0 : index
    %1 = vector.load %arg2[%c0_1, %c0_2] : memref<32x128xbf16, #tpu.memory_space<vmem>>, vector<32x128xbf16>
    %cst = arith.constant dense<0.000000e+00> : vector<16x128xf32>
    %2 = tpu.matmul %0, %1, %cst {dimension_numbers = #tpu.dot_dimension_numbers<[1], [0], [0], [1], [0, 0, 1, 1], [], []>} : vector<16x32xbf16>, vector<32x128xbf16>, vector<16x128xf32> -> vector<16x128xf32>
    %c0_3 = arith.constant 0 : index
    %c0_4 = arith.constant 0 : index
    %3 = vector.load %arg3[%c0_3, %c0_4] : memref<1x128xf32, #tpu.memory_space<vmem>>, vector<1x128xf32>
    %4 = vector.broadcast %3 : vector<1x128xf32> to vector<16x128xf32>
    %5 = arith.addf %2, %4 : vector<16x128xf32>
    %6 = arith.truncf %5 : vector<16x128xf32> to vector<16x128xbf16>
    %c0_5 = arith.constant 0 : index
    %c0_6 = arith.constant 0 : index
    %7 = vector.load %arg4[%c0_5, %c0_6] : memref<16x128xbf16, #tpu.memory_space<vmem>>, vector<16x128xbf16>
    tpu.vector_store %arg4[%c0_5, %c0_6], %6 {strides = array<i32>} : memref<16x128xbf16, #tpu.memory_space<vmem>>, vector<16x128xbf16>,
    return
  }
  func.func @transform_0(%arg0: i32) -> (i32, i32) {
    %c0_i32 = arith.constant 0 : i32
    %c0_i32_0 = arith.constant 0 : i32
    return %arg0, %c0_i32 : i32, i32
  }
  func.func @transform_1(%arg0: i32) -> (i32, i32) {
    %c0_i32 = arith.constant 0 : i32
    %c0_i32_0 = arith.constant 0 : i32
    %c0_i32_1 = arith.constant 0 : i32
    return %c0_i32, %c0_i32_0 : i32, i32
  }
  func.func @transform_2(%arg0: i32) -> (i32, i32) {
    %c0_i32 = arith.constant 0 : i32
    %c0_i32_0 = arith.constant 0 : i32
    %c0_i32_1 = arith.constant 0 : i32
    return %c0_i32, %c0_i32_0 : i32, i32
  }
  func.func @transform_3(%arg0: i32) -> (i32, i32) {
    %c0_i32 = arith.constant 0 : i32
    %c0_i32_0 = arith.constant 0 : i32
    return %arg0, %c0_i32 : i32, i32
  }
}

</mosaic_0001>

<llo_original>
// kernel: tpu_custom_call.1
$region0: #{tpu_custom_call.1}
  #allocation0 [shape = 'u32[]', space=smem, size = 0x4, offset = 0x4, fixed_abs, tag = 'smem constant byte address 0x4 - core index']
  #allocation1 [shape = 'u32[72,128]{1,0:T(1,128)}', space=vmem, size = 0x9000, scoped, tag = 'internal scratch']
  %s0 = inlined_call_operand.hbm [shape: bf16[16,32], index: 0, kind: input, shape index: {}]
  %s1 = inlined_call_operand.hbm [shape: bf16[32,128], index: 1, kind: input, shape index: {}]
  %s2 = inlined_call_operand.vmem [shape: f32[1,128], index: 2, kind: input, shape index: {}]
  %s3 = inlined_call_operand.hbm [shape: bf16[16,128], index: 3, kind: output, shape index: {}]
  %s4 = sld [smem:[#allocation0]]
  $region30: #{tpu_custom_call.1} parent=0
    _
  %s6 = ssub.s32 1, %s4
  %s7 = scalar_select 0, %s6, %s4
  $region1: #{tpu_custom_call.1} parent=0
    #allocation2 [shape = 'u8[4096]{0}', space=vmem, size = 0x1000, scoped, tag = 'input window, operand 0, single buffered']
    #allocation3 [shape = 's32[1]{0}', space=sflag, size = 0x4, scoped, tag = 'scoped memory for tpu_custom_call.1']
    #allocation4 [shape = 's32[1]{0}', space=sflag, size = 0x4, scoped, tag = 'scoped memory for tpu_custom_call.1']
    #allocation5 [shape = 'u8[8192]{0}', space=vmem, size = 0x2000, scoped, tag = 'input window, operand 1, single buffered']
    #allocation6 [shape = 's32[1]{0}', space=sflag, size = 0x4, scoped, tag = 'scoped memory for tpu_custom_call.1']
    #allocation7 [shape = 'u8[4096]{0}', space=vmem, size = 0x1000, scoped, tag = 'output window, operand 0, single buffered']
    %8 = vsyncpa [#allocation3], 0
    %9 = vsyncpa [#allocation6], 0
    %10 = vsyncpa [#allocation4], 0
    // Predicated region
    $region2: #{tpu_custom_call.1} parent=1 // pred_check
      _
    $region3: #{tpu_custom_call.1} parent=1 // pred_check_branch
      %12 = sbr.rel (0) target = $region5
    $region4: #{tpu_custom_call.1} parent=1 // pred_region
      %14 = vsyncadd [#allocation3], 0
      %s15 = sshll.u32 %s0, 4
      %s16 = int_to_ptr.hbm [resolvable:$true] %s15
      %s17 = sshll.u32 [#allocation2], 4
      %s18 = int_to_ptr.vmem [resolvable:$true] %s17
      %23 = dma.hbm_to_vmem [thread:$0]  %s16, 128, %s18, [#allocation3], 64, 64, 4
    $region5: #{tpu_custom_call.1} parent=1 // pred_fallthru
      _
    // Predicated region
    $region6: #{tpu_custom_call.1} parent=1 // pred_check
      _
    $region7: #{tpu_custom_call.1} parent=1 // pred_check_branch
      %25 = sbr.rel (0) target = $region9
    $region8: #{tpu_custom_call.1} parent=1 // pred_region
      %27 = vsyncadd [#allocation6], 0
      %s28 = sshll.u32 %s1, 4
      %s29 = int_to_ptr.hbm [resolvable:$true] %s28
      %s30 = sshll.u32 [#allocation5], 4
      %s31 = int_to_ptr.vmem [resolvable:$true] %s30
      %36 = dma.hbm_to_vmem [thread:$0]  %s29, 256, %s31, [#allocation6], 64, 64, 4
    $region9: #{tpu_custom_call.1} parent=1 // pred_fallthru
      _
    // Predicated region
    $region10: #{tpu_custom_call.1} parent=1 // pred_check
      _
    $region11: #{tpu_custom_call.1} parent=1 // pred_check_branch
      %38 = sbr.rel (0) target = $region13
    $region12: #{tpu_custom_call.1} parent=1 // pred_region
      _
    $region13: #{tpu_custom_call.1} parent=1 // pred_fallthru
      _
    // Predicated region
    $region14: #{tpu_custom_call.1} parent=1 // pred_check
      _
    $region15: #{tpu_custom_call.1} parent=1 // pred_check_branch
      %40 = sbr.rel (0) target = $region17
    $region16: #{tpu_custom_call.1} parent=1 // pred_region
      %42 = dma.done [#allocation3], 128
    $region17: #{tpu_custom_call.1} parent=1 // pred_fallthru
      _
    // Predicated region
    $region18: #{tpu_custom_call.1} parent=1 // pred_check
      _
    $region19: #{tpu_custom_call.1} parent=1 // pred_check_branch
      %44 = sbr.rel (0) target = $region21
    $region20: #{tpu_custom_call.1} parent=1 // pred_region
      %46 = dma.done [#allocation6], 256
    $region21: #{tpu_custom_call.1} parent=1 // pred_fallthru
      _
    %v48 = vld [vmem:[#allocation2] sm:$0xf]
    %v49 = vld [vmem:[#allocation2 + $0x4] sm:$0xf]
    %v50 = vld [vmem:[#allocation5] sm:$0xf]
    %v51 = vld [vmem:[#allocation5 + $0x4] sm:$0xf]
    %v52 = vld [vmem:[#allocation5 + $0x8] sm:$0xf]
    %v53 = vld [vmem:[#allocation5 + $0xc] sm:$0xf]
    %v54 = vld [vmem:[%s2] sm:$0x1]
    %v56 = vperm.slane %v54, 0
    %v60 = vunpack.c.l.b16 %v48
    %v61 = vunpack.c.l.b16 %v49
    %v62 = vpack.c.b16 %v61, %v60
    %v67 = vunpack.c.l.b16 %v50
    %v68 = vunpack.c.l.b16 %v51
    %v69 = vunpack.c.l.b16 %v52
    %v70 = vunpack.c.l.b16 %v53
    %v71 = vpack.c.b16 %v68, %v67
    %v72 = vpack.c.b16 %v70, %v69
    %vm75 = vcmask 261120
    %v77 = vsel %vm75, %v62, 0
    %79 = vmatpush.bf16.msra.mxu0 0
    %80 = vmatpush.bf16.msra.mxu0 0
    %81 = vmatpush.bf16.msra.mxu0 0
    %82 = vmatpush.bf16.msra.mxu0 0
    %83 = vmatpush.bf16.msra.mxu0 0
    %84 = vmatpush.bf16.msra.mxu0 0
    %85 = vmatpush.bf16.msra.mxu0 %v72
    %86 = vmatpush.bf16.msra.mxu0 %v71
    %87 = vmatmul.bf16.gmra.mxu0 %v77
    %v88 = vpop.f32.mrf.mxu0
    %v89 = vadd.f32 %v56, %v88
    %v90 = vpop.f32.mrf.mxu0
    %v91 = vadd.f32 %v56, %v90
    %92 = vdwg.mxu0
    %v93 = vpack.c.bf16 %v89, %v89
    %v94 = vpack.c.bf16 %v91, %v91
    %95 = vst [vmem:[#allocation7] sm:$0xf] %v93
    %96 = vst [vmem:[#allocation7 + $0x4] sm:$0xf] %v94
    // Predicated region
    $region22: #{tpu_custom_call.1} parent=1 // pred_check
      _
    $region23: #{tpu_custom_call.1} parent=1 // pred_check_branch
      %98 = sbr.rel (0) target = $region25
    $region24: #{tpu_custom_call.1} parent=1 // pred_region
      %100 = vsyncadd [#allocation4], 0
      %s101 = sshll.u32 [#allocation7], 4
      %s102 = int_to_ptr.vmem [resolvable:$true] %s101
      %s103 = sshll.u32 %s3, 4
      %s104 = int_to_ptr.hbm [resolvable:$true] %s103
      %109 = dma.vmem_to_hbm [thread:$0]  %s102, 128, %s104, [#allocation4], 64, 64, 4
    $region25: #{tpu_custom_call.1} parent=1 // pred_fallthru
      _
    // Predicated region
    $region26: #{tpu_custom_call.1} parent=1 // pred_check
      _
    $region27: #{tpu_custom_call.1} parent=1 // pred_check_branch
      %111 = sbr.rel (0) target = $region29
    $region28: #{tpu_custom_call.1} parent=1 // pred_region
      %113 = dma.done [#allocation4], 128
    $region29: #{tpu_custom_call.1} parent=1 // pred_fallthru
      _
    %114 = vsyncpa [#allocation3], 1
    %115 = vsyncpa [#allocation6], 1
    %116 = vsyncpa [#allocation4], 1

</llo_original>
